<compile_context>
chip_gen: v5e
topology: v5e:2x2
jax: 0.10.0
libtpu: 0.0.40
codegen_flags: <defaults>
</compile_context>

<pallas_src>
import functools

import jax
import jax.numpy as jnp
import numpy as np
from jax.experimental import pallas as pl
from jax.experimental.pallas import tpu as pltpu

LANE = 128


def _round_up(x, m):
    return (x + m - 1) // m * m


def _elu(y):
    # ELU(alpha=1).  Clamp the exp argument so the unselected (positive) branch
    # cannot produce inf intermediates.  Note ELU(1) == 1 exactly, which the
    # constant-1 bias lanes rely on.
    return jnp.where(y > 0.0, y, jnp.exp(jnp.minimum(y, 0.0)) - 1.0)


# ----------------------------------------------------------------------------
# Fused kernel: one body part per grid step.
# Rows [0:B) carry the vertex branch, rows [B:2B) the joint branch; the weight
# slab is block-structured so both branches (and their biases, via constant-1
# lanes) flow through the same 4 matmuls, and the shared decoder is applied to
# all 2B rows at once.
# ----------------------------------------------------------------------------
def _fused_part_kernel(x_ref, w_ref, o_ref, *, K1, N1, NZP, N3, N4):
    f32 = jnp.float32
    bf16 = jnp.bfloat16
    r1 = K1
    r2 = K1 + N1
    r3 = K1 + N1 + NZP

    # layer 1: spiral-gather+conv (vertex rows) (+) joint fc1 (joint rows)
    h1 = _elu(jnp.dot(x_ref[...], w_ref[0:r1, 0:N1],
                      preferred_element_type=f32))                  # [2B, N1]
    # layer 2: D-folded encoder fc (+) joint fc2 -> latent z (rows = branches)
    z = jnp.dot(h1.astype(bf16), w_ref[r1:r2, 0:NZP],
                preferred_element_type=f32)                         # [2B, NZP]
    # shared decoder fc
    d = _elu(jnp.dot(z.astype(bf16), w_ref[r2:r3, 0:N3],
                     preferred_element_type=f32))                   # [2B, N3]
    # U-folded + spiral-gather-folded decoder conv
    v = jnp.dot(d.astype(bf16), w_ref[r3:r3 + N3, 0:N4],
                preferred_element_type=f32)                         # [2B, N4]

    # single lane-dense output slab: [z | verts], sliced apart in the wrapper
    o_ref[:, 0:NZP] = z
    o_ref[:, NZP:NZP + N4] = v


# ----------------------------------------------------------------------------
# Common (cross-part) lane/row layout of the packed slabs.
# ----------------------------------------------------------------------------
def make_layout(part_cfgs, body_part_list):
    V3max = max(part_cfgs[bp]["V0"] * 3 for bp in body_part_list)
    J3 = part_cfgs[body_part_list[0]]["J"] * 3
    E1max = max(part_cfgs[bp]["V0"] * part_cfgs[bp]["C1"] for bp in body_part_list)
    Hmax = max(part_cfgs[bp]["hidden"] for bp in body_part_list)
    NZmax = max(part_cfgs[bp]["nz"] for bp in body_part_list)
    VC1max = max(part_cfgs[bp]["V1"] * part_cfgs[bp]["C1"] for bp in body_part_list)

    ones_v = 2 * V3max + J3            # constant-1 input lane, vertex branch
    ones_j = ones_v + 1                # constant-1 input lane, joint branch
    K1 = _round_up(ones_j + 1, LANE)
    N1 = _round_up(E1max + Hmax + 2, LANE)   # +2 constant-feed columns
    NZP = _round_up(NZmax + 2, LANE)         # +1 constant column (+1 slack)
    N3 = _round_up(VC1max + 2, LANE)
    N4 = _round_up(V3max, LANE)
    return dict(V3max=V3max, J3=J3, E1max=E1max,
                ones_v=ones_v, ones_j=ones_j,
                K1=K1, N1=N1, NZP=NZP, N3=N3, N4=N4,
                RTOT=K1 + N1 + NZP + N3,
                WLANES=max(N1, NZP, N3, N4))


# ----------------------------------------------------------------------------
# Raw parameter construction (same structure as the torch sub-model would hold)
# ----------------------------------------------------------------------------
def _init(key, shape, scale=0.05):
    return scale * jax.random.normal(key, shape, dtype=jnp.float32)


def make_down(V1, V0):
    rows = jnp.arange(V1)
    D = jnp.zeros((V1, V0), jnp.float32)
    D = D.at[rows, jnp.minimum(2 * rows, V0 - 1)].add(0.5)
    D = D.at[rows, jnp.minimum(2 * rows + 1, V0 - 1)].add(0.5)
    return D


def make_up(V0, V1):
    rows = jnp.arange(V0)
    return jnp.zeros((V0, V1), jnp.float32).at[
        rows, jnp.minimum(rows // 2, V1 - 1)].set(1.0)


def init_part_params(key, cfg):
    V0, V1, S, C1, nz, J, hidden = (cfg[k] for k in
                                    ("V0", "V1", "S", "C1", "nz", "J", "hidden"))
    Cin = 3
    ks = jax.random.split(key, 12)
    spirals = (jnp.arange(V0)[:, None] + jnp.arange(S)[None, :]) % V0
    return {
        "spirals": spirals.astype(jnp.int32),
        "D": make_down(V1, V0),
        "U": make_up(V0, V1),
        "enc_conv_w": _init(ks[0], (S * Cin, C1)),
        "enc_conv_b": _init(ks[6], (C1,)),
        "enc_fc_w": _init(ks[1], (V1 * C1, nz)),
        "enc_fc_b": _init(ks[7], (nz,)),
        "dec_fc_w": _init(ks[2], (nz, V1 * C1)),
        "dec_fc_b": _init(ks[8], (V1 * C1,)),
        "dec_conv_w": _init(ks[3], (S * C1, Cin)),
        "dec_conv_b": _init(ks[9], (Cin,)),
        "j_fc1_w": _init(ks[4], (J * 3 + V0 * 3, hidden)),
        "j_fc1_b": _init(ks[10], (hidden,)),
        "j_fc2_w": _init(ks[5], (hidden, nz)),
        "j_fc2_b": _init(ks[11], (nz,)),
    }


# ----------------------------------------------------------------------------
# One-time packing: fold spiral gather / D / U into the linear weights, fold
# every bias via a constant-1 lane, and place everything in ONE lane-aligned
# bf16 slab per part.  All block offsets are multiples of 128 -> static slices
# inside the kernel are tile-aligned views (zero cost).
# ----------------------------------------------------------------------------
def pack_part_weights(pp, cfg, L):
    V0, V1, S, C1, nz, hidden = (cfg[k] for k in
                                 ("V0", "V1", "S", "C1", "nz", "hidden"))
    Cin = 3
    spir = pp["spirals"]

    # fold static spiral-gather / down / up maps into the conv/fc weights
    G = jax.nn.one_hot(spir, V0, dtype=jnp.float32)                     # [V0,S,V0]
    W_enc1 = jnp.einsum("vsu,sco->ucvo", G,
                        pp["enc_conv_w"].reshape(S, Cin, C1)
                        ).reshape(V0 * Cin, V0 * C1)
    b_enc1 = jnp.tile(pp["enc_conv_b"], V0)
    W_enc2 = jnp.einsum("du,dcn->ucn", pp["D"],
                        pp["enc_fc_w"].reshape(V1, C1, nz)
                        ).reshape(V0 * C1, nz)
    Ug = pp["U"][spir]                                                  # [V0,S,V1]
    W_dec2 = jnp.einsum("vsd,soc->dovc", Ug,
                        pp["dec_conv_w"].reshape(S, C1, Cin)
                        ).reshape(V1 * C1, V0 * Cin)
    b_dec2 = jnp.tile(pp["dec_conv_b"], V0)

    K1, N1, NZP, N3, N4 = L["K1"], L["N1"], L["NZP"], L["N3"], L["N4"]
    V3m, J3, E1 = L["V3max"], L["J3"], L["E1max"]
    ov, oj = L["ones_v"], L["ones_j"]
    cv1, cj1, cz, cd = N1 - 2, N1 - 1, NZP - 1, N3 - 1
    r1, r2, r3 = K1, K1 + N1, K1 + N1 + NZP

    W = jnp.zeros((L["RTOT"], L["WLANES"]), jnp.float32)

    # ---- layer 1 block (rows [0:K1), cols [0:N1)): encoder conv (+) joint fc1
    W = W.at[0:V0 * 3, 0:V0 * C1].set(W_enc1)
    W = W.at[V3m:V3m + J3, E1:E1 + hidden].set(pp["j_fc1_w"][:J3])
    W = W.at[V3m + J3:V3m + J3 + V0 * 3, E1:E1 + hidden].set(pp["j_fc1_w"][J3:])
    W = W.at[ov, 0:V0 * C1].set(b_enc1)            # vertex-branch bias row
    W = W.at[ov, cv1].set(1.0)                     # const-1 feed, vertex branch
    W = W.at[oj, E1:E1 + hidden].set(pp["j_fc1_b"])
    W = W.at[oj, cj1].set(1.0)                     # const-1 feed, joint branch

    # ---- layer 2 block (rows [r1:r2), cols [0:NZP)): D-folded enc fc (+) joint fc2
    W = W.at[r1:r1 + V0 * C1, 0:nz].set(W_enc2)
    W = W.at[r1 + E1:r1 + E1 + hidden, 0:nz].set(pp["j_fc2_w"])
    W = W.at[r1 + cv1, 0:nz].set(pp["enc_fc_b"])
    W = W.at[r1 + cv1, cz].set(1.0)
    W = W.at[r1 + cj1, 0:nz].set(pp["j_fc2_b"])
    W = W.at[r1 + cj1, cz].set(1.0)

    # ---- shared decoder fc block (rows [r2:r3), cols [0:N3))
    W = W.at[r2:r2 + nz, 0:V1 * C1].set(pp["dec_fc_w"])
    W = W.at[r2 + cz, 0:V1 * C1].set(pp["dec_fc_b"])
    W = W.at[r2 + cz, cd].set(1.0)

    # ---- shared decoder conv block (rows [r3:RTOT), cols [0:N4)), U + gather folded
    W = W.at[r3:r3 + V1 * C1, 0:V0 * 3].set(W_dec2)
    W = W.at[r3 + cd, 0:V0 * 3].set(b_dec2)

    return W.astype(jnp.bfloat16)


def _build_part_input(L, cfg, verts, j3d, rest):
    """Pack one part's per-forward data into a [2B, K1] slab (wrapper side)."""
    B = verts.shape[0]
    K1, V3m, J3 = L["K1"], L["V3max"], L["J3"]
    V03 = cfg["V0"] * 3
    xv = jnp.zeros((B, K1), jnp.float32)
    xv = xv.at[:, 0:V03].set(verts.reshape(B, -1).astype(jnp.float32))
    xv = xv.at[:, L["ones_v"]].set(1.0)
    xj = jnp.zeros((B, K1), jnp.float32)
    xj = xj.at[:, V3m:V3m + J3].set(j3d.reshape(B, -1).astype(jnp.float32))
    xj = xj.at[:, V3m + J3:V3m + J3 + V03].set(rest.reshape(B, -1).astype(jnp.float32))
    xj = xj.at[:, L["ones_j"]].set(1.0)
    return jnp.concatenate([xv, xj], axis=0)        # [2B, K1]


# ----------------------------------------------------------------------------
# HumanNetV2 forward: ONE pallas_call for all body parts.
# ----------------------------------------------------------------------------
def human_net_forward(W_all, batch, inp_j3d, *, body_part_list, part_cfgs, layout,
                      dummy_node=True):
    L = layout
    B = inp_j3d.shape[0]
    P = len(body_part_list)
    K1, N1, NZP, N3, N4 = L["K1"], L["N1"], L["NZP"], L["N3"], L["N4"]

    x_all = jnp.stack(
        [_build_part_input(L, part_cfgs[bp], batch[bp + "_verts"], inp_j3d,
                           batch[bp + "_rest_verts"]) for bp in body_part_list],
        axis=0).astype(jnp.bfloat16)                # [P, 2B, K1]

    out = pl.pallas_call(
        functools.partial(_fused_part_kernel, K1=K1, N1=N1, NZP=NZP, N3=N3, N4=N4),
        out_shape=jax.ShapeDtypeStruct((P, 2 * B, NZP + N4), jnp.float32),
        grid_spec=pltpu.PrefetchScalarGridSpec(
            num_scalar_prefetch=0,
            grid=(P,),
            in_specs=[
                pl.BlockSpec((None, 2 * B, K1), lambda p: (p, 0, 0)),
                pl.BlockSpec((None, L["RTOT"], L["WLANES"]), lambda p: (p, 0, 0)),
            ],
            out_specs=pl.BlockSpec((None, 2 * B, NZP + N4), lambda p: (p, 0, 0)),
        ),
        compiler_params=pltpu.CompilerParams(dimension_semantics=("parallel",)),
    )(x_all, W_all)

    pred = {}
    vv, zv, vj, zj = [], [], [], []
    for i, bp in enumerate(body_part_list):
        cfg = part_cfgs[bp]
        V0, nz = cfg["V0"], cfg["nz"]
        o = out[i]                                  # [2B, NZP + N4]
        z_v = o[0:B, 0:nz]
        z_j = o[B:2 * B, 0:nz]
        verts_v = o[0:B, NZP:NZP + V0 * 3].reshape(B, V0, 3)
        verts_j = o[B:2 * B, NZP:NZP + V0 * 3].reshape(B, V0, 3)
        pred[bp + "_z_v"] = z_v
        pred[bp + "_verts_v"] = verts_v
        pred[bp + "_z_j"] = z_j
        pred[bp + "_verts_j"] = verts_j
        vv.append(verts_v[:, :-1] if dummy_node else verts_v)
        zv.append(z_v)
        vj.append(verts_j[:, :-1] if dummy_node else verts_j)
        zj.append(z_j)
    pred["human_verts_v"] = jnp.concatenate(vv, axis=1)
    pred["human_z_v"] = jnp.concatenate(zv, axis=1)
    pred["human_verts_j"] = jnp.concatenate(vj, axis=1)
    pred["human_z_j"] = jnp.concatenate(zj, axis=1)
    return pred


# ----------------------------------------------------------------------------
# Pure-JAX (unfused, float32) reference, used to verify the folding/packing.
# ----------------------------------------------------------------------------
def part_forward_ref(p, cfg, inp_verts, inp_j3d, inp_rest_verts):
    V0, V1, S, C1 = cfg["V0"], cfg["V1"], cfg["S"], cfg["C1"]
    B = inp_verts.shape[0]

    def spiral_conv(x, w, b, act):
        xg = jnp.take(x, p["spirals"].reshape(-1), axis=1)      # [B, V0*S, C]
        y = xg.reshape(B * V0, -1) @ w + b
        if act:
            y = _elu(y)
        return y.reshape(B, V0, -1)

    h = spiral_conv(inp_verts, p["enc_conv_w"], p["enc_conv_b"], True)
    h = jnp.einsum("du,buc->bdc", p["D"], h)
    z_v = h.reshape(B, V1 * C1) @ p["enc_fc_w"] + p["enc_fc_b"]

    def decode(z):
        d = _elu(z @ p["dec_fc_w"] + p["dec_fc_b"]).reshape(B, V1, C1)
        d = jnp.einsum("ud,bdc->buc", p["U"], d)
        return spiral_conv(d, p["dec_conv_w"], p["dec_conv_b"], False)

    pv_v = decode(z_v)
    jr = jnp.concatenate([inp_j3d.reshape(B, -1),
                          inp_rest_verts.reshape(B, -1)], axis=1)
    hj = _elu(jr @ p["j_fc1_w"] + p["j_fc1_b"])
    z_j = hj @ p["j_fc2_w"] + p["j_fc2_b"]
    pv_j = decode(z_j)
    return z_v, pv_v, z_j, pv_j


# ----------------------------------------------------------------------------
if __name__ == "__main__":
    key = jax.random.PRNGKey(0)
    B, J = 2, 8
    body_part_list = ["body", "hand"]
    # vertex counts include the trailing dummy node (opt.dataset.dummy_node=True)
    part_cfg = {
        "body": dict(V0=17, V1=9, S=4, C1=16, nz=16, J=J, hidden=32),
        "hand": dict(V0=9, V1=5, S=4, C1=8, nz=8, J=J, hidden=32),
    }
    layout = make_layout(part_cfg, body_part_list)

    k_param, k_data = jax.random.split(key)
    raw_params = {
        bp: init_part_params(jax.random.fold_in(k_param, i), part_cfg[bp])
        for i, bp in enumerate(body_part_list)
    }
    # Fold static maps + biases and pack each part's weights into one bf16 slab.
    W_all = jnp.stack([pack_part_weights(raw_params[bp], part_cfg[bp], layout)
                       for bp in body_part_list], axis=0)       # [P, RTOT, WLANES]

    batch = {}
    kd = k_data
    for bp in body_part_list:
        kd, k1, k2 = jax.random.split(kd, 3)
        V0 = part_cfg[bp]["V0"]
        batch[bp + "_verts"] = jax.random.normal(k1, (B, V0, 3), jnp.float32)
        batch[bp + "_rest_verts"] = jax.random.normal(k2, (B, V0, 3), jnp.float32)
    kd, kj = jax.random.split(kd)
    inp_j3d = jax.random.normal(kj, (B, J, 3), jnp.float32)

    fwd = jax.jit(functools.partial(
        human_net_forward, body_part_list=body_part_list,
        part_cfgs=part_cfg, layout=layout, dummy_node=True))
    pred = jax.block_until_ready(fwd(W_all, batch, inp_j3d))

    # shape sanity on concatenated outputs (dummy node dropped per part)
    assert pred["human_verts_v"].shape == (B, 16 + 8, 3)
    assert pred["human_z_v"].shape == (B, 16 + 8)
    assert pred["human_verts_j"].shape == (B, 16 + 8, 3)
    assert pred["human_z_j"].shape == (B, 16 + 8)

    # numeric check of the fused/folded bf16-MXU kernel vs. the f32 reference
    # (tolerance loosened slightly vs. the all-f32 version to cover bf16 operands)
    for bp in body_part_list:
        z_v_r, pv_v_r, z_j_r, pv_j_r = part_forward_ref(
            raw_params[bp], part_cfg[bp],
            batch[bp + "_verts"], inp_j3d, batch[bp + "_rest_verts"])
        np.testing.assert_allclose(pred[bp + "_z_v"], z_v_r, atol=2e-2, rtol=2e-2)
        np.testing.assert_allclose(pred[bp + "_verts_v"], pv_v_r, atol=2e-2, rtol=2e-2)
        np.testing.assert_allclose(pred[bp + "_z_j"], z_j_r, atol=2e-2, rtol=2e-2)
        np.testing.assert_allclose(pred[bp + "_verts_j"], pv_j_r, atol=2e-2, rtol=2e-2)

    print("KERNEL_OK")
</pallas_src>

<mosaic_0001>
module attributes {stable_mosaic.version = 11 : i64} {
  func.func @_fused_part_kernel(%arg0: i32, %arg1: memref<1x4x128xbf16, #tpu.memory_space<vmem>>, %arg2: memref<1x896x384xbf16, #tpu.memory_space<vmem>>, %arg3: memref<1x4x256xf32, #tpu.memory_space<vmem>>) attributes {dimension_semantics = [#tpu.dimension_semantics<parallel>], iteration_bounds = array<i64: 2>, scalar_prefetch = 0 : i64, scratch_operands = 0 : i64, tpu.core_type = #tpu.core_type<tc>, window_params = [{transform_indices = @transform_0, window_bounds = array<i64: 1, 4, 128>}, {transform_indices = @transform_1, window_bounds = array<i64: 1, 896, 384>}, {transform_indices = @transform_2, window_bounds = array<i64: 1, 4, 256>}]} {
    %c0 = arith.constant 0 : index
    %c0_0 = arith.constant 0 : index
    %c0_1 = arith.constant 0 : index
    %0 = vector.load %arg1[%c0, %c0_0, %c0_1] : memref<1x4x128xbf16, #tpu.memory_space<vmem>>, vector<1x4x128xbf16>
    %1 = vector.shape_cast %0 : vector<1x4x128xbf16> to vector<4x128xbf16>
    %c0_2 = arith.constant 0 : index
    %c0_3 = arith.constant 0 : index
    %c0_4 = arith.constant 0 : index
    %2 = vector.load %arg2[%c0_2, %c0_3, %c0_4] : memref<1x896x384xbf16, #tpu.memory_space<vmem>>, vector<1x128x384xbf16>
    %3 = vector.shape_cast %2 : vector<1x128x384xbf16> to vector<128x384xbf16>
    %cst = arith.constant dense<0.000000e+00> : vector<4x384xf32>
    %4 = tpu.matmul %1, %3, %cst {dimension_numbers = #tpu.dot_dimension_numbers<[1], [0], [0], [1], [0, 0, 1, 1], [], []>} : vector<4x128xbf16>, vector<128x384xbf16>, vector<4x384xf32> -> vector<4x384xf32>
    %cst_5 = arith.constant 0.000000e+00 : f32
    %5 = vector.broadcast %cst_5 : f32 to vector<4x384xf32>
    %6 = arith.cmpf ogt, %4, %5 : vector<4x384xf32>
    %cst_6 = arith.constant 0.000000e+00 : f32
    %7 = vector.broadcast %cst_6 : f32 to vector<4x384xf32>
    %8 = arith.minimumf %4, %7 : vector<4x384xf32>
    %9 = math.exp %8 : vector<4x384xf32>
    %cst_7 = arith.constant 1.000000e+00 : f32
    %10 = vector.broadcast %cst_7 : f32 to vector<4x384xf32>
    %11 = arith.subf %9, %10 : vector<4x384xf32>
    %12 = arith.select %6, %4, %11 : vector<4x384xi1>, vector<4x384xf32>
    %13 = arith.truncf %12 : vector<4x384xf32> to vector<4x384xbf16>
    %c0_8 = arith.constant 0 : index
    %c128 = arith.constant 128 : index
    %c0_9 = arith.constant 0 : index
    %14 = vector.load %arg2[%c0_8, %c128, %c0_9] : memref<1x896x384xbf16, #tpu.memory_space<vmem>>, vector<1x384x128xbf16>
    %15 = vector.shape_cast %14 : vector<1x384x128xbf16> to vector<384x128xbf16>
    %cst_10 = arith.constant dense<0.000000e+00> : vector<4x128xf32>
    %16 = tpu.matmul %13, %15, %cst_10 {dimension_numbers = #tpu.dot_dimension_numbers<[1], [0], [0], [1], [0, 0, 1, 1], [], []>} : vector<4x384xbf16>, vector<384x128xbf16>, vector<4x128xf32> -> vector<4x128xf32>
    %17 = arith.truncf %16 : vector<4x128xf32> to vector<4x128xbf16>
    %c0_11 = arith.constant 0 : index
    %c512 = arith.constant 512 : index
    %c0_12 = arith.constant 0 : index
    %18 = vector.load %arg2[%c0_11, %c512, %c0_12] : memref<1x896x384xbf16, #tpu.memory_space<vmem>>, vector<1x128x256xbf16>
    %19 = vector.shape_cast %18 : vector<1x128x256xbf16> to vector<128x256xbf16>
    %cst_13 = arith.constant dense<0.000000e+00> : vector<4x256xf32>
    %20 = tpu.matmul %17, %19, %cst_13 {dimension_numbers = #tpu.dot_dimension_numbers<[1], [0], [0], [1], [0, 0, 1, 1], [], []>} : vector<4x128xbf16>, vector<128x256xbf16>, vector<4x256xf32> -> vector<4x256xf32>
    %cst_14 = arith.constant 0.000000e+00 : f32
    %21 = vector.broadcast %cst_14 : f32 to vector<4x256xf32>
    %22 = arith.cmpf ogt, %20, %21 : vector<4x256xf32>
    %cst_15 = arith.constant 0.000000e+00 : f32
    %23 = vector.broadcast %cst_15 : f32 to vector<4x256xf32>
    %24 = arith.minimumf %20, %23 : vector<4x256xf32>
    %25 = math.exp %24 : vector<4x256xf32>
    %cst_16 = arith.constant 1.000000e+00 : f32
    %26 = vector.broadcast %cst_16 : f32 to vector<4x256xf32>
    %27 = arith.subf %25, %26 : vector<4x256xf32>
    %28 = arith.select %22, %20, %27 : vector<4x256xi1>, vector<4x256xf32>
    %29 = arith.truncf %28 : vector<4x256xf32> to vector<4x256xbf16>
    %c0_17 = arith.constant 0 : index
    %c640 = arith.constant 640 : index
    %c0_18 = arith.constant 0 : index
    %30 = vector.load %arg2[%c0_17, %c640, %c0_18] : memref<1x896x384xbf16, #tpu.memory_space<vmem>>, vector<1x256x128xbf16>
    %31 = vector.shape_cast %30 : vector<1x256x128xbf16> to vector<256x128xbf16>
    %cst_19 = arith.constant dense<0.000000e+00> : vector<4x128xf32>
    %32 = tpu.matmul %29, %31, %cst_19 {dimension_numbers = #tpu.dot_dimension_numbers<[1], [0], [0], [1], [0, 0, 1, 1], [], []>} : vector<4x256xbf16>, vector<256x128xbf16>, vector<4x128xf32> -> vector<4x128xf32>
    %c0_20 = arith.constant 0 : index
    %c0_21 = arith.constant 0 : index
    %c0_22 = arith.constant 0 : index
    %33 = vector.load %arg3[%c0_20, %c0_21, %c0_22] : memref<1x4x256xf32, #tpu.memory_space<vmem>>, vector<1x4x128xf32>
    %34 = vector.shape_cast %33 : vector<1x4x128xf32> to vector<4x128xf32>
    %35 = vector.shape_cast %16 : vector<4x128xf32> to vector<1x4x128xf32>
    tpu.vector_store %arg3[%c0_20, %c0_21, %c0_22], %35 {strides = array<i32>} : memref<1x4x256xf32, #tpu.memory_space<vmem>>, vector<1x4x128xf32>,
    %c0_23 = arith.constant 0 : index
    %c0_24 = arith.constant 0 : index
    %c128_25 = arith.constant 128 : index
    %36 = vector.load %arg3[%c0_23, %c0_24, %c128_25] : memref<1x4x256xf32, #tpu.memory_space<vmem>>, vector<1x4x128xf32>
    %37 = vector.shape_cast %36 : vector<1x4x128xf32> to vector<4x128xf32>
    %38 = vector.shape_cast %32 : vector<4x128xf32> to vector<1x4x128xf32>
    tpu.vector_store %arg3[%c0_23, %c0_24, %c128_25], %38 {strides = array<i32>} : memref<1x4x256xf32, #tpu.memory_space<vmem>>, vector<1x4x128xf32>,
    return
  }
  func.func @transform_0(%arg0: i32) -> (i32, i32, i32) {
    %c0_i32 = arith.constant 0 : i32
    %c0_i32_0 = arith.constant 0 : i32
    %c0_i32_1 = arith.constant 0 : i32
    return %arg0, %c0_i32, %c0_i32_0 : i32, i32, i32
  }
  func.func @transform_1(%arg0: i32) -> (i32, i32, i32) {
    %c0_i32 = arith.constant 0 : i32
    %c0_i32_0 = arith.constant 0 : i32
    %c0_i32_1 = arith.constant 0 : i32
    return %arg0, %c0_i32, %c0_i32_0 : i32, i32, i32
  }
  func.func @transform_2(%arg0: i32) -> (i32, i32, i32) {
    %c0_i32 = arith.constant 0 : i32
    %c0_i32_0 = arith.constant 0 : i32
    %c0_i32_1 = arith.constant 0 : i32
    return %arg0, %c0_i32, %c0_i32_0 : i32, i32, i32
  }
}

</mosaic_0001>

<llo_original>
// kernel: human_net_forward.1
$region0: #{human_net_forward.1}
  #allocation0 [shape = 'u32[]', space=smem, size = 0x4, offset = 0x4, fixed_abs, tag = 'smem constant byte address 0x4 - core index']
  #allocation1 [shape = 'u32[72,128]{1,0:T(1,128)}', space=vmem, size = 0x9000, scoped, tag = 'internal scratch']
  %s0 = inlined_call_operand.vmem [shape: bf16[2,4,128], index: 0, kind: input, shape index: {}]
  %s1 = inlined_call_operand.hbm [shape: bf16[2,896,384], index: 1, kind: input, shape index: {}]
  %s2 = inlined_call_operand.vmem [shape: f32[2,4,256], index: 2, kind: output, shape index: {}]
  %s3 = sld [smem:[#allocation0]]
  $region45: #{human_net_forward.1} parent=0
    _
  %s5 = ssub.s32 1, %s3
  %s6 = scalar_select 0, %s5, %s3
  $region1: #{human_net_forward.1} parent=0
    #allocation2 [shape = 'u8[1376256]{0}', space=vmem, size = 0x150000, scoped, tag = 'input window, operand 1']
    #allocation3 [shape = 's32[2]{0}', space=sflag, size = 0x8, scoped, tag = 'scoped memory for human_net_forward.1']
    %7 = vsyncpa [#allocation3], 0
    %s8 = scalar_lea.sflag [#allocation3], 1
    %9 = vsyncpa %s8, 0
    loop: start=0, step=1, limit=4
    $region2: #{human_net_forward.1} parent=1 // loop_pre_header
      _
    $region3: #{human_net_forward.1} parent=1 // loop_header
      %s11 = sphi 0, %s15
      %p12 = scmp.ge.s32.totalorder %s11, 4
      %s21 = sphi 0, %s23
      %s24 = sphi 0, %s21
      %s25 = sphi 0, %s24
      %s41 = sphi 0, %s25
      %s47 = sphi 0, %s49
      %s50 = sphi 0, %s47
      %s51 = sphi 0, %s50
      %s67 = sphi 0, %s51
      %s73 = sphi 0, %s75
      %s76 = sphi 0, %s73
      %s77 = sphi 0, %s76
      %s93 = sphi 0, %s77
    $region4: #{human_net_forward.1} parent=1 // loop_header_branch
      %14 = sbr.rel (%p12) target = $region8
    $region5: #{human_net_forward.1} parent=1 // loop_body
      %s16 = ssub.s32 %s11, 1
      %s17 = ssub.s32 %s11, 2
      %s18 = sadd.s32 %s11, 1
      %s19 = ssub.s32 %s11, %s18
      %p20 = scmp.eq.s32.totalorder %s19, 0
      %s22 = sadd.s32 %s21, 1
      %s23 = scalar_select %p20, %s21, %s22
      %p26 = pneg %p20
      %p27 = scmp.eq.s32.totalorder %s11, 1
      %p28 = por %p26, %p27
      %p29 = scmp.ne.s32.totalorder %s21, %s24
      %p30 = scmp.eq.s32.totalorder %s11, 0
      %p31 = por %p29, %p30
      %p32 = scmp.ne.s32.totalorder %s21, %s24
      %p33 = scmp.eq.s32.totalorder %s16, 1
      %p34 = por %p32, %p33
      %p35 = scmp.ne.s32.totalorder %s24, %s25
      %p36 = scmp.eq.s32.totalorder %s16, 0
      %p37 = por %p35, %p36
      %p38 = scmp.ne.s32.totalorder %s24, %s25
      %p39 = scmp.eq.s32.totalorder %s17, 1
      %p40 = por %p38, %p39
      %p42 = scmp.ne.s32.totalorder %s25, %s41
      %p43 = scmp.eq.s32.totalorder %s17, 0
      %p44 = por %p42, %p43
      %s45 = ssub.s32 %s11, %s18
      %p46 = scmp.eq.s32.totalorder %s45, 0
      %s48 = sadd.s32 %s47, 1
      %s49 = scalar_select %p46, %s47, %s48
      %p52 = pneg %p46
      %p53 = scmp.eq.s32.totalorder %s11, 1
      %p54 = por %p52, %p53
      %p55 = scmp.ne.s32.totalorder %s47, %s50
      %p56 = scmp.eq.s32.totalorder %s11, 0
      %p57 = por %p55, %p56
      %p58 = scmp.ne.s32.totalorder %s47, %s50
      %p59 = scmp.eq.s32.totalorder %s16, 1
      %p60 = por %p58, %p59
      %p61 = scmp.ne.s32.totalorder %s50, %s51
      %p62 = scmp.eq.s32.totalorder %s16, 0
      %p63 = por %p61, %p62
      %p64 = scmp.ne.s32.totalorder %s50, %s51
      %p65 = scmp.eq.s32.totalorder %s17, 1
      %p66 = por %p64, %p65
      %p68 = scmp.ne.s32.totalorder %s51, %s67
      %p69 = scmp.eq.s32.totalorder %s17, 0
      %p70 = por %p68, %p69
      %s71 = ssub.s32 %s11, %s18
      %p72 = scmp.eq.s32.totalorder %s71, 0
      %s74 = sadd.s32 %s73, 1
      %s75 = scalar_select %p72, %s73, %s74
      %p78 = pneg %p72
      %p79 = scmp.eq.s32.totalorder %s11, 1
      %p80 = por %p78, %p79
      %p81 = scmp.ne.s32.totalorder %s73, %s76
      %p82 = scmp.eq.s32.totalorder %s11, 0
      %p83 = por %p81, %p82
      %p84 = scmp.ne.s32.totalorder %s73, %s76
      %p85 = scmp.eq.s32.totalorder %s16, 1
      %p86 = por %p84, %p85
      %p87 = scmp.ne.s32.totalorder %s76, %s77
      %p88 = scmp.eq.s32.totalorder %s16, 0
      %p89 = por %p87, %p88
      %p90 = scmp.ne.s32.totalorder %s76, %s77
      %p91 = scmp.eq.s32.totalorder %s17, 1
      %p92 = por %p90, %p91
      %p94 = scmp.ne.s32.totalorder %s77, %s93
      %p95 = scmp.eq.s32.totalorder %s17, 0
      %p96 = por %p94, %p95
      %p97 = scmp.le.s32.totalorder 1, %s11
      %p98 = scmp.lt.s32.totalorder %s11, 3
      %p99 = pnand %p97, %p98
      %p100 = pneg %p99
      // Predicated region
      $region9: #{human_net_forward.1} parent=5 // pred_check
        _
      $region10: #{human_net_forward.1} parent=5 // pred_check_branch
        %102 = sbr.rel (%p99) target = $region12
      $region11: #{human_net_forward.1} parent=5 // pred_region
        %s103 = ssub.s32 %s11, 1
      $region12: #{human_net_forward.1} parent=5 // pred_fallthru
        _
      %p104 = scmp.lt.s32.totalorder %s11, 2
      // Predicated region
      $region13: #{human_net_forward.1} parent=5 // pred_check
        %p105 = pneg %p104
      $region14: #{human_net_forward.1} parent=5 // pred_check_branch
        %107 = sbr.rel (%p105) target = $region16
      $region15: #{human_net_forward.1} parent=5 // pred_region
        // Predicated region
        $region17: #{human_net_forward.1} parent=15 // pred_check
          %p108 = pneg %p31
        $region18: #{human_net_forward.1} parent=15 // pred_check_branch
          %110 = sbr.rel (%p108) target = $region20
        $region19: #{human_net_forward.1} parent=15 // pred_region
          %p111 = scmp.lt.s32.totalorder %s11, 1
          %s112 = scalar_select %p111, %s11, 1
          %s113 = smul.addr %s112, 2
          %s114 = scalar_lea.vmem %s0, %s113
        $region20: #{human_net_forward.1} parent=15 // pred_fallthru
          _
        // Predicated region
        $region21: #{human_net_forward.1} parent=15 // pred_check
          %p115 = pneg %p57
        $region22: #{human_net_forward.1} parent=15 // pred_check_branch
          %117 = sbr.rel (%p115) target = $region24
        $region23: #{human_net_forward.1} parent=15 // pred_region
          %s118 = sand.u32 %s47, 1
          %s119 = scalar_lea.sflag [#allocation3], %s118
          %s120 = sand.u32 %s47, 1
          %s121 = smul.addr %s120, 1344
          %s122 = scalar_lea.vmem [#allocation2], %s121
          %124 = vsyncadd %s119, 0
          %s125 = smul.addr %s11, 336
          %s126 = smul.addr %s125, 4
          %s127 = scalar_lea.hbm %s1, %s126
          %s128 = sshll.u32 %s127, 4
          %s129 = int_to_ptr.hbm [resolvable:$true] %s128
          %s130 = sshll.u32 %s122, 4
          %s131 = int_to_ptr.vmem [resolvable:$true] %s130
          %136 = dma.hbm_to_vmem [thread:$0]  %s129, 21504, %s131, %s119, 192, 192, 12
        $region24: #{human_net_forward.1} parent=15 // pred_fallthru
          _
      $region16: #{human_net_forward.1} parent=5 // pred_fallthru
        _
      %p137 = scmp.le.s32.totalorder 1, %s11
      %p138 = scmp.lt.s32.totalorder %s11, 3
      %p139 = pnand %p137, %p138
      %p140 = pneg %p139
      // Predicated region
      $region25: #{human_net_forward.1} parent=5 // pred_check
        _
      $region26: #{human_net_forward.1} parent=5 // pred_check_branch
        %142 = sbr.rel (%p139) target = $region28
      $region27: #{human_net_forward.1} parent=5 // pred_region
        %s143 = ssub.s32 %s11, 1
        %s144 = sand.u32 %s50, 1
        %s145 = scalar_lea.sflag [#allocation3], %s144
        %s146 = sand.u32 %s50, 1
        %s147 = smul.addr %s146, 1344
        %s148 = scalar_lea.vmem [#allocation2], %s147
        // Predicated region
        $region29: #{human_net_forward.1} parent=27 // pred_check
          %p149 = pneg %p63
        $region30: #{human_net_forward.1} parent=27 // pred_check_branch
          %151 = sbr.rel (%p149) target = $region32
        $region31: #{human_net_forward.1} parent=27 // pred_region
          %153 = dma.done %s145, 21504
        $region32: #{human_net_forward.1} parent=27 // pred_fallthru
          _
        %p154 = scmp.lt.s32.totalorder %s16, 1
        %s155 = scalar_select %p154, %s16, 1
        %s156 = smul.addr %s155, 2
        %s157 = scalar_lea.vmem %s0, %s156
        %p158 = pneg %p37
        %p159 = pneg %p34
        %s160 = sand.u32 %s50, 1
        %s161 = scalar_lea.sflag [#allocation3], %s160
        %s162 = sand.u32 %s50, 1
        %s163 = smul.addr %s162, 1344
        %s164 = scalar_lea.vmem [#allocation2], %s163
        %p165 = pneg %p63
        %p166 = pneg %p60
        %p167 = pneg %p89
        %p168 = pneg %p86
        %p169 = scmp.lt.s32.totalorder %s16, 1
        %s170 = scalar_select %p169, %s16, 1
        %s171 = smul.addr %s170, 2
        %s172 = smul.addr %s171, 4
        %s173 = scalar_lea.vmem %s2, %s172
        %p174 = scmp.lt.s32.totalorder %s16, 1
        %s175 = scalar_select %p174, %s16, 1
        %s176 = smul.addr %s175, 2
        %s177 = scalar_lea.vmem %s0, %s176
        %p178 = scmp.lt.s32.totalorder %s16, 1
        %s179 = scalar_select %p178, %s16, 1
        %s180 = smul.addr %s179, 2
        %s181 = smul.addr %s180, 4
        %s182 = scalar_lea.vmem %s2, %s181
        %v183 = vld [vmem:[%s177] sm:$0x3]
        %v184 = vld [vmem:[%s148] sm:$0xff]
        %v185 = vld [vmem:[%s148 + $0x8] sm:$0xf]
        %v186 = vld [vmem:[%s148 + $0xc] sm:$0xff]
        %v187 = vld [vmem:[%s148 + $0x14] sm:$0xf]
        %v188 = vld [vmem:[%s148 + $0x18] sm:$0xff]
        %v189 = vld [vmem:[%s148 + $0x20] sm:$0xf]
        %v190 = vld [vmem:[%s148 + $0x24] sm:$0xff]
        %v191 = vld [vmem:[%s148 + $0x2c] sm:$0xf]
        %v192 = vld [vmem:[%s148 + $0x30] sm:$0xff]
        %v193 = vld [vmem:[%s148 + $0x38] sm:$0xf]
        %v194 = vld [vmem:[%s148 + $0x3c] sm:$0xff]
        %v195 = vld [vmem:[%s148 + $0x44] sm:$0xf]
        %v196 = vld [vmem:[%s148 + $0x48] sm:$0xff]
        %v197 = vld [vmem:[%s148 + $0x50] sm:$0xf]
        %v198 = vld [vmem:[%s148 + $0x54] sm:$0xff]
        %v199 = vld [vmem:[%s148 + $0x5c] sm:$0xf]
        %v200 = vld [vmem:[%s148 + $0x60] sm:$0xff]
        %v201 = vld [vmem:[%s148 + $0x68] sm:$0xf]
        %v202 = vld [vmem:[%s148 + $0x6c] sm:$0xff]
        %v203 = vld [vmem:[%s148 + $0x74] sm:$0xf]
        %v204 = vld [vmem:[%s148 + $0x78] sm:$0xff]
        %v205 = vld [vmem:[%s148 + $0x80] sm:$0xf]
        %v206 = vld [vmem:[%s148 + $0x84] sm:$0xff]
        %v207 = vld [vmem:[%s148 + $0x8c] sm:$0xf]
        %v208 = vld [vmem:[%s148 + $0x90] sm:$0xff]
        %v209 = vld [vmem:[%s148 + $0x98] sm:$0xf]
        %v210 = vld [vmem:[%s148 + $0x9c] sm:$0xff]
        %v211 = vld [vmem:[%s148 + $0xa4] sm:$0xf]
        %v212 = vld [vmem:[%s148 + $0xa8] sm:$0xff]
        %v213 = vld [vmem:[%s148 + $0xb0] sm:$0xf]
        %v214 = vld [vmem:[%s148 + $0xb4] sm:$0xff]
        %v215 = vld [vmem:[%s148 + $0xbc] sm:$0xf]
        %v248 = vunpack.c.l.b16 %v184
        %v249 = vunpack.c.h.b16 %v184
        %v250 = vunpack.c.l.b16 %v185
        %v251 = vunpack.c.l.b16 %v186
        %v252 = vunpack.c.h.b16 %v186
        %v253 = vunpack.c.l.b16 %v187
        %v254 = vunpack.c.l.b16 %v188
        %v255 = vunpack.c.h.b16 %v188
        %v256 = vunpack.c.l.b16 %v189
        %v257 = vunpack.c.l.b16 %v190
        %v258 = vunpack.c.h.b16 %v190
        %v259 = vunpack.c.l.b16 %v191
        %v260 = vunpack.c.l.b16 %v192
        %v261 = vunpack.c.h.b16 %v192
        %v262 = vunpack.c.l.b16 %v193
        %v263 = vunpack.c.l.b16 %v194
        %v264 = vunpack.c.h.b16 %v194
        %v265 = vunpack.c.l.b16 %v195
        %v266 = vunpack.c.l.b16 %v196
        %v267 = vunpack.c.h.b16 %v196
        %v268 = vunpack.c.l.b16 %v197
        %v269 = vunpack.c.l.b16 %v198
        %v270 = vunpack.c.h.b16 %v198
        %v271 = vunpack.c.l.b16 %v199
        %v272 = vunpack.c.l.b16 %v200
        %v273 = vunpack.c.h.b16 %v200
        %v274 = vunpack.c.l.b16 %v201
        %v275 = vunpack.c.l.b16 %v202
        %v276 = vunpack.c.h.b16 %v202
        %v277 = vunpack.c.l.b16 %v203
        %v278 = vunpack.c.l.b16 %v204
        %v279 = vunpack.c.h.b16 %v204
        %v280 = vunpack.c.l.b16 %v205
        %v281 = vunpack.c.l.b16 %v206
        %v282 = vunpack.c.h.b16 %v206
        %v283 = vunpack.c.l.b16 %v207
        %v284 = vunpack.c.l.b16 %v208
        %v285 = vunpack.c.h.b16 %v208
        %v286 = vunpack.c.l.b16 %v209
        %v287 = vunpack.c.l.b16 %v210
        %v288 = vunpack.c.h.b16 %v210
        %v289 = vunpack.c.l.b16 %v211
        %v290 = vunpack.c.l.b16 %v212
        %v291 = vunpack.c.h.b16 %v212
        %v292 = vunpack.c.l.b16 %v213
        %v293 = vunpack.c.l.b16 %v214
        %v294 = vunpack.c.h.b16 %v214
        %v295 = vunpack.c.l.b16 %v215
        %v296 = vpack.c.b16 %v251, %v248
        %v297 = vpack.c.b16 %v252, %v249
        %v298 = vpack.c.b16 %v253, %v250
        %v299 = vpack.c.b16 %v257, %v254
        %v300 = vpack.c.b16 %v258, %v255
        %v301 = vpack.c.b16 %v259, %v256
        %v302 = vpack.c.b16 %v263, %v260
        %v303 = vpack.c.b16 %v264, %v261
        %v304 = vpack.c.b16 %v265, %v262
        %v305 = vpack.c.b16 %v269, %v266
        %v306 = vpack.c.b16 %v270, %v267
        %v307 = vpack.c.b16 %v271, %v268
        %v308 = vpack.c.b16 %v275, %v272
        %v309 = vpack.c.b16 %v276, %v273
        %v310 = vpack.c.b16 %v277, %v274
        %v311 = vpack.c.b16 %v281, %v278
        %v312 = vpack.c.b16 %v282, %v279
        %v313 = vpack.c.b16 %v283, %v280
        %v314 = vpack.c.b16 %v287, %v284
        %v315 = vpack.c.b16 %v288, %v285
        %v316 = vpack.c.b16 %v289, %v286
        %v317 = vpack.c.b16 %v293, %v290
        %v318 = vpack.c.b16 %v294, %v291
        %v319 = vpack.c.b16 %v295, %v292
        %344 = vmatpush.bf16.msra.mxu0 %v317
        %345 = vmatpush.bf16.msra.mxu0 %v314
        %346 = vmatpush.bf16.msra.mxu0 %v311
        %347 = vmatpush.bf16.msra.mxu0 %v308
        %348 = vmatpush.bf16.msra.mxu0 %v305
        %349 = vmatpush.bf16.msra.mxu0 %v302
        %350 = vmatpush.bf16.msra.mxu0 %v299
        %351 = vmatpush.bf16.msra.mxu0 %v296
        %352 = vmatmul.bf16.gmra.mxu0 %v183
        %v353 = vpop.f32.mrf.mxu0
        %v354 = vadd.f32 0.0, %v353
        %v355 = vpop.f32.mrf.mxu0
        %356 = vdwg.mxu0
        %357 = vmatpush.bf16.msra.mxu0 %v318
        %358 = vmatpush.bf16.msra.mxu0 %v315
        %359 = vmatpush.bf16.msra.mxu0 %v312
        %360 = vmatpush.bf16.msra.mxu0 %v309
        %361 = vmatpush.bf16.msra.mxu0 %v306
        %362 = vmatpush.bf16.msra.mxu0 %v303
        %363 = vmatpush.bf16.msra.mxu0 %v300
        %364 = vmatpush.bf16.msra.mxu0 %v297
        %365 = vmatmul.bf16.gmra.mxu0 %v183
        %v366 = vpop.f32.mrf.mxu0
        %v367 = vadd.f32 0.0, %v366
        %v368 = vpop.f32.mrf.mxu0
        %369 = vdwg.mxu0
        %370 = vmatpush.bf16.msra.mxu0 %v319
        %371 = vmatpush.bf16.msra.mxu0 %v316
        %372 = vmatpush.bf16.msra.mxu0 %v313
        %373 = vmatpush.bf16.msra.mxu0 %v310
        %374 = vmatpush.bf16.msra.mxu0 %v307
        %375 = vmatpush.bf16.msra.mxu0 %v304
        %376 = vmatpush.bf16.msra.mxu0 %v301
        %377 = vmatpush.bf16.msra.mxu0 %v298
        %378 = vmatmul.bf16.gmra.mxu0 %v183
        %v379 = vpop.f32.mrf.mxu0
        %v380 = vadd.f32 0.0, %v379
        %v381 = vpop.f32.mrf.mxu0
        %382 = vdwg.mxu0
        %vm383 = vcmp.gt.f32.partialorder %v354, 0.0
        %vm384 = vcmp.gt.f32.partialorder %v367, 0.0
        %vm385 = vcmp.gt.f32.partialorder %v380, 0.0
        %v386 = vmin.f32 %v354, 0.0
        %v387 = vmin.f32 %v367, 0.0
        %v388 = vmin.f32 %v380, 0.0
        %v389 = vmul.f32 %v386, 1.442695
        %v390 = vpow.pop %v389
        %v391 = vmul.f32 %v387, 1.442695
        %v392 = vpow.pop %v391
        %v393 = vmul.f32 %v388, 1.442695
        %v394 = vpow.pop %v393
        %v395 = vsub.f32 %v390, 1.0
        %v396 = vsub.f32 %v392, 1.0
        %v397 = vsub.f32 %v394, 1.0
        %v398 = vsel %vm383, %v354, %v395
        %v399 = vsel %vm384, %v367, %v396
        %v400 = vsel %vm385, %v380, %v397
        %v401 = vpack.c.bf16 %v398, %v398
        %v402 = vpack.c.bf16 %v399, %v399
        %v403 = vpack.c.bf16 %v400, %v400
        %v404 = vld [vmem:[%s148 + $0xc0] sm:$0xf]
        %v405 = vld [vmem:[%s148 + $0xcc] sm:$0xf]
        %v406 = vld [vmem:[%s148 + $0xd8] sm:$0xf]
        %v407 = vld [vmem:[%s148 + $0xe4] sm:$0xf]
        %v408 = vld [vmem:[%s148 + $0xf0] sm:$0xf]
        %v409 = vld [vmem:[%s148 + $0xfc] sm:$0xf]
        %v410 = vld [vmem:[%s148 + $0x108] sm:$0xf]
        %v411 = vld [vmem:[%s148 + $0x114] sm:$0xf]
        %v412 = vld [vmem:[%s148 + $0x120] sm:$0xf]
        %v413 = vld [vmem:[%s148 + $0x12c] sm:$0xf]
        %v414 = vld [vmem:[%s148 + $0x138] sm:$0xf]
        %v415 = vld [vmem:[%s148 + $0x144] sm:$0xf]
        %v416 = vld [vmem:[%s148 + $0x150] sm:$0xf]
        %v417 = vld [vmem:[%s148 + $0x15c] sm:$0xf]
        %v418 = vld [vmem:[%s148 + $0x168] sm:$0xf]
        %v419 = vld [vmem:[%s148 + $0x174] sm:$0xf]
        %v420 = vld [vmem:[%s148 + $0x180] sm:$0xf]
        %v421 = vld [vmem:[%s148 + $0x18c] sm:$0xf]
        %v422 = vld [vmem:[%s148 + $0x198] sm:$0xf]
        %v423 = vld [vmem:[%s148 + $0x1a4] sm:$0xf]
        %v424 = vld [vmem:[%s148 + $0x1b0] sm:$0xf]
        %v425 = vld [vmem:[%s148 + $0x1bc] sm:$0xf]
        %v426 = vld [vmem:[%s148 + $0x1c8] sm:$0xf]
        %v427 = vld [vmem:[%s148 + $0x1d4] sm:$0xf]
        %v428 = vld [vmem:[%s148 + $0x1e0] sm:$0xf]
        %v429 = vld [vmem:[%s148 + $0x1ec] sm:$0xf]
        %v430 = vld [vmem:[%s148 + $0x1f8] sm:$0xf]
        %v431 = vld [vmem:[%s148 + $0x204] sm:$0xf]
        %v432 = vld [vmem:[%s148 + $0x210] sm:$0xf]
        %v433 = vld [vmem:[%s148 + $0x21c] sm:$0xf]
        %v434 = vld [vmem:[%s148 + $0x228] sm:$0xf]
        %v435 = vld [vmem:[%s148 + $0x234] sm:$0xf]
        %v436 = vld [vmem:[%s148 + $0x240] sm:$0xf]
        %v437 = vld [vmem:[%s148 + $0x24c] sm:$0xf]
        %v438 = vld [vmem:[%s148 + $0x258] sm:$0xf]
        %v439 = vld [vmem:[%s148 + $0x264] sm:$0xf]
        %v440 = vld [vmem:[%s148 + $0x270] sm:$0xf]
        %v441 = vld [vmem:[%s148 + $0x27c] sm:$0xf]
        %v442 = vld [vmem:[%s148 + $0x288] sm:$0xf]
        %v443 = vld [vmem:[%s148 + $0x294] sm:$0xf]
        %v444 = vld [vmem:[%s148 + $0x2a0] sm:$0xf]
        %v445 = vld [vmem:[%s148 + $0x2ac] sm:$0xf]
        %v446 = vld [vmem:[%s148 + $0x2b8] sm:$0xf]
        %v447 = vld [vmem:[%s148 + $0x2c4] sm:$0xf]
        %v448 = vld [vmem:[%s148 + $0x2d0] sm:$0xf]
        %v449 = vld [vmem:[%s148 + $0x2dc] sm:$0xf]
        %v450 = vld [vmem:[%s148 + $0x2e8] sm:$0xf]
        %v451 = vld [vmem:[%s148 + $0x2f4] sm:$0xf]
        %v500 = vunpack.c.l.b16 %v404
        %v501 = vunpack.c.l.b16 %v405
        %v502 = vunpack.c.l.b16 %v406
        %v503 = vunpack.c.l.b16 %v407
        %v504 = vunpack.c.l.b16 %v408
        %v505 = vunpack.c.l.b16 %v409
        %v506 = vunpack.c.l.b16 %v410
        %v507 = vunpack.c.l.b16 %v411
        %v508 = vunpack.c.l.b16 %v412
        %v509 = vunpack.c.l.b16 %v413
        %v510 = vunpack.c.l.b16 %v414
        %v511 = vunpack.c.l.b16 %v415
        %v512 = vunpack.c.l.b16 %v416
        %v513 = vunpack.c.l.b16 %v417
        %v514 = vunpack.c.l.b16 %v418
        %v515 = vunpack.c.l.b16 %v419
        %v516 = vunpack.c.l.b16 %v420
        %v517 = vunpack.c.l.b16 %v421
        %v518 = vunpack.c.l.b16 %v422
        %v519 = vunpack.c.l.b16 %v423
        %v520 = vunpack.c.l.b16 %v424
        %v521 = vunpack.c.l.b16 %v425
        %v522 = vunpack.c.l.b16 %v426
        %v523 = vunpack.c.l.b16 %v427
        %v524 = vunpack.c.l.b16 %v428
        %v525 = vunpack.c.l.b16 %v429
        %v526 = vunpack.c.l.b16 %v430
        %v527 = vunpack.c.l.b16 %v431
        %v528 = vunpack.c.l.b16 %v432
        %v529 = vunpack.c.l.b16 %v433
        %v530 = vunpack.c.l.b16 %v434
        %v531 = vunpack.c.l.b16 %v435
        %v532 = vunpack.c.l.b16 %v436
        %v533 = vunpack.c.l.b16 %v437
        %v534 = vunpack.c.l.b16 %v438
        %v535 = vunpack.c.l.b16 %v439
        %v536 = vunpack.c.l.b16 %v440
        %v537 = vunpack.c.l.b16 %v441
        %v538 = vunpack.c.l.b16 %v442
        %v539 = vunpack.c.l.b16 %v443
        %v540 = vunpack.c.l.b16 %v444
        %v541 = vunpack.c.l.b16 %v445
        %v542 = vunpack.c.l.b16 %v446
        %v543 = vunpack.c.l.b16 %v447
        %v544 = vunpack.c.l.b16 %v448
        %v545 = vunpack.c.l.b16 %v449
        %v546 = vunpack.c.l.b16 %v450
        %v547 = vunpack.c.l.b16 %v451
        %v548 = vpack.c.b16 %v501, %v500
        %v549 = vpack.c.b16 %v503, %v502
        %v550 = vpack.c.b16 %v505, %v504
        %v551 = vpack.c.b16 %v507, %v506
        %v552 = vpack.c.b16 %v509, %v508
        %v553 = vpack.c.b16 %v511, %v510
        %v554 = vpack.c.b16 %v513, %v512
        %v555 = vpack.c.b16 %v515, %v514
        %v556 = vpack.c.b16 %v517, %v516
        %v557 = vpack.c.b16 %v519, %v518
        %v558 = vpack.c.b16 %v521, %v520
        %v559 = vpack.c.b16 %v523, %v522
        %v560 = vpack.c.b16 %v525, %v524
        %v561 = vpack.c.b16 %v527, %v526
        %v562 = vpack.c.b16 %v529, %v528
        %v563 = vpack.c.b16 %v531, %v530
        %v564 = vpack.c.b16 %v533, %v532
        %v565 = vpack.c.b16 %v535, %v534
        %v566 = vpack.c.b16 %v537, %v536
        %v567 = vpack.c.b16 %v539, %v538
        %v568 = vpack.c.b16 %v541, %v540
        %v569 = vpack.c.b16 %v543, %v542
        %v570 = vpack.c.b16 %v545, %v544
        %v571 = vpack.c.b16 %v547, %v546
        %596 = vmatpush.bf16.msra.mxu0 %v555
        %597 = vmatpush.bf16.msra.mxu0 %v554
        %598 = vmatpush.bf16.msra.mxu0 %v553
        %599 = vmatpush.bf16.msra.mxu0 %v552
        %600 = vmatpush.bf16.msra.mxu0 %v551
        %601 = vmatpush.bf16.msra.mxu0 %v550
        %602 = vmatpush.bf16.msra.mxu0 %v549
        %603 = vmatpush.bf16.msra.mxu0 %v548
        %604 = vmatmul.bf16.gmra.mxu0 %v401
        %v605 = vpop.f32.mrf.mxu0
        %v606 = vadd.f32 0.0, %v605
        %v607 = vpop.f32.mrf.mxu0
        %608 = vdwg.mxu0
        %609 = vmatpush.bf16.msra.mxu0 %v563
        %610 = vmatpush.bf16.msra.mxu0 %v562
        %611 = vmatpush.bf16.msra.mxu0 %v561
        %612 = vmatpush.bf16.msra.mxu0 %v560
        %613 = vmatpush.bf16.msra.mxu0 %v559
        %614 = vmatpush.bf16.msra.mxu0 %v558
        %615 = vmatpush.bf16.msra.mxu0 %v557
        %616 = vmatpush.bf16.msra.mxu0 %v556
        %617 = vmatmul.bf16.gmra.mxu0 %v402
        %v618 = vpop.f32.mrf.mxu0
        %v619 = vadd.f32 %v606, %v618
        %v620 = vpop.f32.mrf.mxu0
        %621 = vdwg.mxu0
        %622 = vmatpush.bf16.msra.mxu0 %v571
        %623 = vmatpush.bf16.msra.mxu0 %v570
        %624 = vmatpush.bf16.msra.mxu0 %v569
        %625 = vmatpush.bf16.msra.mxu0 %v568
        %626 = vmatpush.bf16.msra.mxu0 %v567
        %627 = vmatpush.bf16.msra.mxu0 %v566
        %628 = vmatpush.bf16.msra.mxu0 %v565
        %629 = vmatpush.bf16.msra.mxu0 %v564
        %630 = vmatmul.bf16.gmra.mxu0 %v403
        %v631 = vpop.f32.mrf.mxu0
        %v632 = vadd.f32 %v619, %v631
        %v633 = vpop.f32.mrf.mxu0
        %634 = vdwg.mxu0
        %v635 = vpack.c.bf16 %v632, %v632
        %v636 = vld [vmem:[%s148 + $0x300] sm:$0xff]
        %v637 = vld [vmem:[%s148 + $0x30c] sm:$0xff]
        %v638 = vld [vmem:[%s148 + $0x318] sm:$0xff]
        %v639 = vld [vmem:[%s148 + $0x324] sm:$0xff]
        %v640 = vld [vmem:[%s148 + $0x330] sm:$0xff]
        %v641 = vld [vmem:[%s148 + $0x33c] sm:$0xff]
        %v642 = vld [vmem:[%s148 + $0x348] sm:$0xff]
        %v643 = vld [vmem:[%s148 + $0x354] sm:$0xff]
        %v644 = vld [vmem:[%s148 + $0x360] sm:$0xff]
        %v645 = vld [vmem:[%s148 + $0x36c] sm:$0xff]
        %v646 = vld [vmem:[%s148 + $0x378] sm:$0xff]
        %v647 = vld [vmem:[%s148 + $0x384] sm:$0xff]
        %v648 = vld [vmem:[%s148 + $0x390] sm:$0xff]
        %v649 = vld [vmem:[%s148 + $0x39c] sm:$0xff]
        %v650 = vld [vmem:[%s148 + $0x3a8] sm:$0xff]
        %v651 = vld [vmem:[%s148 + $0x3b4] sm:$0xff]
        %v668 = vunpack.c.l.b16 %v636
        %v669 = vunpack.c.h.b16 %v636
        %v670 = vunpack.c.l.b16 %v637
        %v671 = vunpack.c.h.b16 %v637
        %v672 = vunpack.c.l.b16 %v638
        %v673 = vunpack.c.h.b16 %v638
        %v674 = vunpack.c.l.b16 %v639
        %v675 = vunpack.c.h.b16 %v639
        %v676 = vunpack.c.l.b16 %v640
        %v677 = vunpack.c.h.b16 %v640
        %v678 = vunpack.c.l.b16 %v641
        %v679 = vunpack.c.h.b16 %v641
        %v680 = vunpack.c.l.b16 %v642
        %v681 = vunpack.c.h.b16 %v642
        %v682 = vunpack.c.l.b16 %v643
        %v683 = vunpack.c.h.b16 %v643
        %v684 = vunpack.c.l.b16 %v644
        %v685 = vunpack.c.h.b16 %v644
        %v686 = vunpack.c.l.b16 %v645
        %v687 = vunpack.c.h.b16 %v645
        %v688 = vunpack.c.l.b16 %v646
        %v689 = vunpack.c.h.b16 %v646
        %v690 = vunpack.c.l.b16 %v647
        %v691 = vunpack.c.h.b16 %v647
        %v692 = vunpack.c.l.b16 %v648
        %v693 = vunpack.c.h.b16 %v648
        %v694 = vunpack.c.l.b16 %v649
        %v695 = vunpack.c.h.b16 %v649
        %v696 = vunpack.c.l.b16 %v650
        %v697 = vunpack.c.h.b16 %v650
        %v698 = vunpack.c.l.b16 %v651
        %v699 = vunpack.c.h.b16 %v651
        %v700 = vpack.c.b16 %v670, %v668
        %v701 = vpack.c.b16 %v671, %v669
        %v702 = vpack.c.b16 %v674, %v672
        %v703 = vpack.c.b16 %v675, %v673
        %v704 = vpack.c.b16 %v678, %v676
        %v705 = vpack.c.b16 %v679, %v677
        %v706 = vpack.c.b16 %v682, %v680
        %v707 = vpack.c.b16 %v683, %v681
        %v708 = vpack.c.b16 %v686, %v684
        %v709 = vpack.c.b16 %v687, %v685
        %v710 = vpack.c.b16 %v690, %v688
        %v711 = vpack.c.b16 %v691, %v689
        %v712 = vpack.c.b16 %v694, %v692
        %v713 = vpack.c.b16 %v695, %v693
        %v714 = vpack.c.b16 %v698, %v696
        %v715 = vpack.c.b16 %v699, %v697
        %732 = vmatpush.bf16.msra.mxu0 %v714
        %733 = vmatpush.bf16.msra.mxu0 %v712
        %734 = vmatpush.bf16.msra.mxu0 %v710
        %735 = vmatpush.bf16.msra.mxu0 %v708
        %736 = vmatpush.bf16.msra.mxu0 %v706
        %737 = vmatpush.bf16.msra.mxu0 %v704
        %738 = vmatpush.bf16.msra.mxu0 %v702
        %739 = vmatpush.bf16.msra.mxu0 %v700
        %740 = vmatmul.bf16.gmra.mxu0 %v635
        %v741 = vpop.f32.mrf.mxu0
        %v742 = vadd.f32 0.0, %v741
        %v743 = vpop.f32.mrf.mxu0
        %744 = vdwg.mxu0
        %745 = vmatpush.bf16.msra.mxu0 %v715
        %746 = vmatpush.bf16.msra.mxu0 %v713
        %747 = vmatpush.bf16.msra.mxu0 %v711
        %748 = vmatpush.bf16.msra.mxu0 %v709
        %749 = vmatpush.bf16.msra.mxu0 %v707
        %750 = vmatpush.bf16.msra.mxu0 %v705
        %751 = vmatpush.bf16.msra.mxu0 %v703
        %752 = vmatpush.bf16.msra.mxu0 %v701
        %753 = vmatmul.bf16.gmra.mxu0 %v635
        %v754 = vpop.f32.mrf.mxu0
        %v755 = vadd.f32 0.0, %v754
        %v756 = vpop.f32.mrf.mxu0
        %757 = vdwg.mxu0
        %vm758 = vcmp.gt.f32.partialorder %v742, 0.0
        %vm759 = vcmp.gt.f32.partialorder %v755, 0.0
        %v760 = vmin.f32 %v742, 0.0
        %v761 = vmin.f32 %v755, 0.0
        %v762 = vmul.f32 %v760, 1.442695
        %v763 = vpow.pop %v762
        %v764 = vmul.f32 %v761, 1.442695
        %v765 = vpow.pop %v764
        %v766 = vsub.f32 %v763, 1.0
        %v767 = vsub.f32 %v765, 1.0
        %v768 = vsel %vm758, %v742, %v766
        %v769 = vsel %vm759, %v755, %v767
        %v770 = vpack.c.bf16 %v768, %v768
        %v771 = vpack.c.bf16 %v769, %v769
        %v772 = vld [vmem:[%s148 + $0x3c0] sm:$0xf]
        %v773 = vld [vmem:[%s148 + $0x3cc] sm:$0xf]
        %v774 = vld [vmem:[%s148 + $0x3d8] sm:$0xf]
        %v775 = vld [vmem:[%s148 + $0x3e4] sm:$0xf]
        %v776 = vld [vmem:[%s148 + $0x3f0] sm:$0xf]
        %v777 = vld [vmem:[%s148 + $0x3fc] sm:$0xf]
        %v778 = vld [vmem:[%s148 + $0x408] sm:$0xf]
        %v779 = vld [vmem:[%s148 + $0x414] sm:$0xf]
        %v780 = vld [vmem:[%s148 + $0x420] sm:$0xf]
        %v781 = vld [vmem:[%s148 + $0x42c] sm:$0xf]
        %v782 = vld [vmem:[%s148 + $0x438] sm:$0xf]
        %v783 = vld [vmem:[%s148 + $0x444] sm:$0xf]
        %v784 = vld [vmem:[%s148 + $0x450] sm:$0xf]
        %v785 = vld [vmem:[%s148 + $0x45c] sm:$0xf]
        %v786 = vld [vmem:[%s148 + $0x468] sm:$0xf]
        %v787 = vld [vmem:[%s148 + $0x474] sm:$0xf]
        %v788 = vld [vmem:[%s148 + $0x480] sm:$0xf]
        %v789 = vld [vmem:[%s148 + $0x48c] sm:$0xf]
        %v790 = vld [vmem:[%s148 + $0x498] sm:$0xf]
        %v791 = vld [vmem:[%s148 + $0x4a4] sm:$0xf]
        %v792 = vld [vmem:[%s148 + $0x4b0] sm:$0xf]
        %v793 = vld [vmem:[%s148 + $0x4bc] sm:$0xf]
        %v794 = vld [vmem:[%s148 + $0x4c8] sm:$0xf]
        %v795 = vld [vmem:[%s148 + $0x4d4] sm:$0xf]
        %v796 = vld [vmem:[%s148 + $0x4e0] sm:$0xf]
        %v797 = vld [vmem:[%s148 + $0x4ec] sm:$0xf]
        %v798 = vld [vmem:[%s148 + $0x4f8] sm:$0xf]
        %v799 = vld [vmem:[%s148 + $0x504] sm:$0xf]
        %v800 = vld [vmem:[%s148 + $0x510] sm:$0xf]
        %v801 = vld [vmem:[%s148 + $0x51c] sm:$0xf]
        %v802 = vld [vmem:[%s148 + $0x528] sm:$0xf]
        %v803 = vld [vmem:[%s148 + $0x534] sm:$0xf]
        %v836 = vunpack.c.l.b16 %v772
        %v837 = vunpack.c.l.b16 %v773
        %v838 = vunpack.c.l.b16 %v774
        %v839 = vunpack.c.l.b16 %v775
        %v840 = vunpack.c.l.b16 %v776
        %v841 = vunpack.c.l.b16 %v777
        %v842 = vunpack.c.l.b16 %v778
        %v843 = vunpack.c.l.b16 %v779
        %v844 = vunpack.c.l.b16 %v780
        %v845 = vunpack.c.l.b16 %v781
        %v846 = vunpack.c.l.b16 %v782
        %v847 = vunpack.c.l.b16 %v783
        %v848 = vunpack.c.l.b16 %v784
        %v849 = vunpack.c.l.b16 %v785
        %v850 = vunpack.c.l.b16 %v786
        %v851 = vunpack.c.l.b16 %v787
        %v852 = vunpack.c.l.b16 %v788
        %v853 = vunpack.c.l.b16 %v789
        %v854 = vunpack.c.l.b16 %v790
        %v855 = vunpack.c.l.b16 %v791
        %v856 = vunpack.c.l.b16 %v792
        %v857 = vunpack.c.l.b16 %v793
        %v858 = vunpack.c.l.b16 %v794
        %v859 = vunpack.c.l.b16 %v795
        %v860 = vunpack.c.l.b16 %v796
        %v861 = vunpack.c.l.b16 %v797
        %v862 = vunpack.c.l.b16 %v798
        %v863 = vunpack.c.l.b16 %v799
        %v864 = vunpack.c.l.b16 %v800
        %v865 = vunpack.c.l.b16 %v801
        %v866 = vunpack.c.l.b16 %v802
        %v867 = vunpack.c.l.b16 %v803
        %v868 = vpack.c.b16 %v837, %v836
        %v869 = vpack.c.b16 %v839, %v838
        %v870 = vpack.c.b16 %v841, %v840
        %v871 = vpack.c.b16 %v843, %v842
        %v872 = vpack.c.b16 %v845, %v844
        %v873 = vpack.c.b16 %v847, %v846
        %v874 = vpack.c.b16 %v849, %v848
        %v875 = vpack.c.b16 %v851, %v850
        %v876 = vpack.c.b16 %v853, %v852
        %v877 = vpack.c.b16 %v855, %v854
        %v878 = vpack.c.b16 %v857, %v856
        %v879 = vpack.c.b16 %v859, %v858
        %v880 = vpack.c.b16 %v861, %v860
        %v881 = vpack.c.b16 %v863, %v862
        %v882 = vpack.c.b16 %v865, %v864
        %v883 = vpack.c.b16 %v867, %v866
        %900 = vmatpush.bf16.msra.mxu0 %v875
        %901 = vmatpush.bf16.msra.mxu0 %v874
        %902 = vmatpush.bf16.msra.mxu0 %v873
        %903 = vmatpush.bf16.msra.mxu0 %v872
        %904 = vmatpush.bf16.msra.mxu0 %v871
        %905 = vmatpush.bf16.msra.mxu0 %v870
        %906 = vmatpush.bf16.msra.mxu0 %v869
        %907 = vmatpush.bf16.msra.mxu0 %v868
        %908 = vmatmul.bf16.gmra.mxu0 %v770
        %v909 = vpop.f32.mrf.mxu0
        %v910 = vadd.f32 0.0, %v909
        %v911 = vpop.f32.mrf.mxu0
        %912 = vdwg.mxu0
        %913 = vmatpush.bf16.msra.mxu0 %v883
        %914 = vmatpush.bf16.msra.mxu0 %v882
        %915 = vmatpush.bf16.msra.mxu0 %v881
        %916 = vmatpush.bf16.msra.mxu0 %v880
        %917 = vmatpush.bf16.msra.mxu0 %v879
        %918 = vmatpush.bf16.msra.mxu0 %v878
        %919 = vmatpush.bf16.msra.mxu0 %v877
        %920 = vmatpush.bf16.msra.mxu0 %v876
        %921 = vmatmul.bf16.gmra.mxu0 %v771
        %v922 = vpop.f32.mrf.mxu0
        %v923 = vadd.f32 %v910, %v922
        %v924 = vpop.f32.mrf.mxu0
        %925 = vdwg.mxu0
        %926 = vst [vmem:[%s182] sm:$0xf] %v632
        %927 = vst [vmem:[%s182 + $0x4] sm:$0xf] %v923
        %p928 = scmp.lt.s32.totalorder %s16, 1
        %s929 = scalar_select %p928, %s16, 1
        %s930 = smul.addr %s929, 2
        %s931 = smul.addr %s930, 4
        %s932 = scalar_lea.vmem %s2, %s931
        // Predicated region
        $region33: #{human_net_forward.1} parent=27 // pred_check
          %p933 = pneg %p86
        $region34: #{human_net_forward.1} parent=27 // pred_check_branch
          %935 = sbr.rel (%p933) target = $region36
        $region35: #{human_net_forward.1} parent=27 // pred_region
          _
        $region36: #{human_net_forward.1} parent=27 // pred_fallthru
          _
      $region28: #{human_net_forward.1} parent=5 // pred_fallthru
        _
      %p936 = scmp.le.s32.totalorder 2, %s11
      // Predicated region
      $region37: #{human_net_forward.1} parent=5 // pred_check
        %p937 = pneg %p936
      $region38: #{human_net_forward.1} parent=5 // pred_check_branch
        %939 = sbr.rel (%p937) target = $region40
      $region39: #{human_net_forward.1} parent=5 // pred_region
        %s940 = ssub.s32 %s11, 2
        // Predicated region
        $region41: #{human_net_forward.1} parent=39 // pred_check
          %p941 = pneg %p92
        $region42: #{human_net_forward.1} parent=39 // pred_check_branch
          %943 = sbr.rel (%p941) target = $region44
        $region43: #{human_net_forward.1} parent=39 // pred_region
          %p944 = scmp.lt.s32.totalorder %s17, 1
          %s945 = scalar_select %p944, %s17, 1
          %s946 = smul.addr %s945, 2
          %s947 = smul.addr %s946, 4
          %s948 = scalar_lea.vmem %s2, %s947
        $region44: #{human_net_forward.1} parent=39 // pred_fallthru
          _
      $region40: #{human_net_forward.1} parent=5 // pred_fallthru
        _
    $region6: #{human_net_forward.1} parent=1 // loop_footer
      %s15 = sadd.s32 1, %s11
    $region7: #{human_net_forward.1} parent=1 // loop_footer_branch
      %10 = sbr.rel target = $region3
    $region8: #{human_net_forward.1} parent=1 // loop_exit
      _
    %949 = vsyncpa [#allocation3], 1
    %s950 = scalar_lea.sflag [#allocation3], 1
    %951 = vsyncpa %s950, 1

</llo_original>
